<compile_context>
chip_gen: v7x
topology: tpu7x:2x2x1
jax: 0.10.0
libtpu: 0.0.40
codegen_flags: <defaults>
</compile_context>

<pallas_src>
import functools

import jax
import jax.numpy as jnp
from jax.experimental import pallas as pl
from jax.experimental.pallas import tpu as pltpu


def _round_up(x, m):
    return ((x + m - 1) // m) * m


def _device_caps():
    """Returns (enc per-buffer budget, vmem-limit cap, has 2 TensorCores)."""
    try:
        kind = jax.devices()[0].device_kind.lower()
    except Exception:  # pragma: no cover - defensive
        kind = ""
    if "v5" in kind or "v6" in kind:
        # 128 MiB physical VMEM, single TensorCore per chip.
        return 16 * 1024 * 1024, 64 * 1024 * 1024, False
    # v7x-class (64 MiB physical VMEM, 2 TensorCores) and unknown parts:
    # be conservative so the kernel always fits.
    return 12 * 1024 * 1024, 48 * 1024 * 1024, True


def _predictor_kernel(abcd_ref,    # SMEM (4,) float32  gates a,b,c,d
                      enc_ref,     # VMEM (b_tile, l_tile, D)
                      w_ref,       # VMEM (D, G*Tp) fused, pre-transposed, zero-padded
                      out_ref,     # VMEM (b_tile, Tp)
                      acc_ref,     # VMEM scratch (b_tile, D) f32 running sum
                      *, seq_len, num_groups):
    l = pl.program_id(1)

    # ---- init accumulator on the first L step of each batch tile ----
    @pl.when(l == 0)
    def _init():
        acc_ref[...] = jnp.zeros_like(acc_ref)

    # ---- streaming reduction over L (mem-bound part, pipelined by BlockSpec) ----
    enc = enc_ref[...].astype(jnp.float32)          # (b_tile, l_tile, D)
    acc_ref[...] += jnp.sum(enc, axis=1)            # partial sum over this L tile

    # ---- finalize: projection, normalize, tanh -- only on the last L step ----
    @pl.when(l == pl.num_programs(1) - 1)
    def _finalize():
        # data = enc_output.sum(1) / enc_output.size()[1]
        data = acc_ref[...] / jnp.float32(seq_len)                      # (b_tile, D)

        # One fused MXU matmul for all 4 heads (weights already (D, G*Tp)).
        p = jnp.dot(data, w_ref[...], preferred_element_type=jnp.float32)

        tp = out_ref.shape[1]                        # padded type dim (multiple of 128)
        out = jnp.zeros(out_ref.shape, jnp.float32)
        for g in range(num_groups):
            pg = p[:, g * tp:(g + 1) * tp]           # lane-aligned static slice
            # F.normalize(pg, p=2, dim=-1, eps=1e-5): pg / max(||pg||, eps).
            # Padded weight columns are exactly 0, so the sum of squares over
            # Tp equals the sum over T.
            sumsq = jnp.sum(pg * pg, axis=-1, keepdims=True)
            inv = pl.reciprocal(jnp.maximum(jnp.sqrt(sumsq), jnp.float32(1e-5)),
                                approx=True)         # EUP path (co-issues with VPU)
            out = out + abcd_ref[g] * (pg * inv)
        out_ref[...] = jnp.tanh(out).astype(out_ref.dtype)


def _forward_impl(enc_output, event_type, w1, w2, w3, w4, abcd,
                  *, single_buffer_weights):
    B, L, D = enc_output.shape
    T = w1.shape[0]
    G = 4
    Tp = _round_up(T, 128)            # lane-dense (padded) output width

    enc_buf_budget, vmem_cap, two_cores = _device_caps()

    # ---- batch tiling --------------------------------------------------------
    if B <= 8:
        b_tile, Bp = B, B                         # single full-extent batch tile
    elif B % 8 == 0:
        b_tile, Bp = 8, B                         # >=2 tiles, shards across cores
    else:
        Bp8 = _round_up(B, 8)
        # Pad when the extra streamed (zero) rows are modest, or when a
        # 2-TensorCore part can use the >=2-way batch grid.
        if two_cores or (Bp8 - B) * 4 <= B:
            b_tile, Bp = 8, Bp8
        else:
            b_tile, Bp = B, B

    # ---- L tiling (VMEM-budget aware, minimal zero padding) ------------------
    itemsize = jnp.dtype(enc_output.dtype).itemsize
    w_bytes = D * G * Tp * 4                      # one weight buffer
    out_bytes = 2 * b_tile * Tp * 4               # double-buffered output blocks
    acc_bytes = b_tile * D * 4
    # Budget the worst case (double-buffered weights) so the fallback also fits.
    fixed_bytes = 2 * w_bytes + out_bytes + acc_bytes

    avail_enc = max(2 * b_tile * 8 * D * itemsize,
                    int(vmem_cap * 0.8) - fixed_bytes)
    per_buf = min(enc_buf_budget, avail_enc // 2)
    row_bytes = max(1, b_tile * D * itemsize)
    max_rows = max(8, (per_buf // row_bytes) // 8 * 8)

    best_rows = min(max_rows, 1024, _round_up(L, 8))
    best_rows = max(8, (best_rows // 8) * 8)
    lo = max(8, (best_rows // 2 // 8) * 8)
    l_tile, Lp = best_rows, _round_up(L, best_rows)
    for cand in range(best_rows, lo - 1, -8):     # minimize padded rows
        lp = _round_up(L, cand)
        if lp < Lp:
            l_tile, Lp = cand, lp

    grid = (Bp // b_tile, Lp // l_tile)

    # ---- pad inputs (zeros do not change the sum; seq_len stays = L) ---------
    pad_b, pad_l = Bp - B, Lp - L
    if pad_b or pad_l:
        enc_p = jnp.pad(enc_output, ((0, pad_b), (0, pad_l), (0, 0)))
    else:
        enc_p = enc_output

    # ---- fuse + pre-transpose + lane-pad the four weight matrices ------------
    # (G, T, D) -> pad T to Tp -> (D, G, Tp) -> (D, G*Tp); done once in XLA.
    w_stack = jnp.stack([w1, w2, w3, w4], axis=0).astype(jnp.float32)   # (G, T, D)
    w_stack = jnp.pad(w_stack, ((0, 0), (0, Tp - T), (0, 0)))           # (G, Tp, D)
    w_cat = jnp.transpose(w_stack, (2, 0, 1)).reshape(D, G * Tp)        # (D, G*Tp)

    # ---- VMEM limit from the real footprint + 25% headroom -------------------
    enc_bytes = 2 * b_tile * l_tile * D * itemsize
    footprint = enc_bytes + fixed_bytes
    vmem_limit = int(max(16 * 1024 * 1024,
                         min(vmem_cap, footprint * 1.25),
                         footprint * 1.1))

    if single_buffer_weights:
        # Constant block index -> one resident buffer is enough; double
        # buffering it only wastes VMEM that the enc tiles could use.
        w_spec = pl.BlockSpec((D, G * Tp), lambda b, l: (0, 0),
                              pipeline_mode=pl.Buffered(1))
    else:
        w_spec = pl.BlockSpec((D, G * Tp), lambda b, l: (0, 0))

    kernel = functools.partial(_predictor_kernel, seq_len=L, num_groups=G)

    out_p = pl.pallas_call(
        kernel,
        out_shape=jax.ShapeDtypeStruct((Bp, Tp), jnp.float32),
        grid_spec=pltpu.PrefetchScalarGridSpec(
            num_scalar_prefetch=0,
            grid=grid,
            in_specs=[
                pl.BlockSpec(memory_space=pltpu.MemorySpace.SMEM),          # abcd scalars
                pl.BlockSpec((b_tile, l_tile, D), lambda b, l: (b, l, 0)),  # enc tiles
                w_spec,                                                     # fused weights
            ],
            out_specs=pl.BlockSpec((b_tile, Tp), lambda b, l: (b, 0)),
            scratch_shapes=[pltpu.VMEM((b_tile, D), jnp.float32)],
        ),
        compiler_params=pltpu.CompilerParams(
            dimension_semantics=("parallel", "arbitrary"),
            vmem_limit_bytes=vmem_limit,
        ),
    )(abcd.astype(jnp.float32), enc_p, w_cat)

    out = out_p[:B, :T]                                      # strip padding

    # target_: ones(B, T); zero column (e - 1) for every nonzero event type e.
    # Pure XLA (depends only on event_type) -- kept out of the kernel epilogue.
    type_ids = jnp.arange(1, T + 1, dtype=event_type.dtype)
    hit = jnp.any(event_type[:, :, None] == type_ids[None, None, :], axis=1)
    target = jnp.where(hit, 0.0, 1.0).astype(jnp.float32)
    return out, target


_forward_single = jax.jit(functools.partial(_forward_impl, single_buffer_weights=True))
_forward_double = jax.jit(functools.partial(_forward_impl, single_buffer_weights=False))


def predictor_forward(enc_output, event_type, user_type, w1, w2, w3, w4, abcd):
    # user_type is unused by the reference forward pass; kept for signature parity.
    del user_type
    args = (enc_output, event_type, w1, w2, w3, w4, abcd)
    try:
        return _forward_single(*args)
    except Exception:
        # Fallback for JAX versions that reject single-buffered (Buffered(1))
        # BlockSpecs on the top-level pallas_call pipeline.
        return _forward_double(*args)


def _xavier_normal(key, out_features, in_features):
    std = (2.0 / (in_features + out_features)) ** 0.5
    return std * jax.random.normal(key, (out_features, in_features), dtype=jnp.float32)


def _reference(enc_output, event_type, w1, w2, w3, w4, abcd):
    data = enc_output.sum(axis=1) / enc_output.shape[1]

    def pn(w):
        p = data @ w.T
        n = jnp.sqrt(jnp.sum(p * p, axis=-1, keepdims=True))
        return p / jnp.maximum(n, 1e-5)

    out = jnp.tanh(pn(w1) * abcd[0] + pn(w2) * abcd[1]
                   + pn(w3) * abcd[2] + pn(w4) * abcd[3])
    T = w1.shape[0]
    type_ids = jnp.arange(1, T + 1, dtype=jnp.int32)
    hit = jnp.any(event_type[:, :, None] == type_ids[None, None, :], axis=1)
    tgt = jnp.where(hit, 0.0, 1.0).astype(jnp.float32)
    return out, tgt


if __name__ == "__main__":
    # Small shapes consistent with the module.
    B, L, D, T = 2, 8, 32, 8          # batch, seq len, hidden dim, num_types
    Lev = 8                            # event sequence length

    key = jax.random.PRNGKey(0)
    k_enc, k_ev, k1, k2, k3, k4 = jax.random.split(key, 6)

    enc_output = jax.random.normal(k_enc, (B, L, D), dtype=jnp.float32)
    # event types in [0, T]; 0 acts as padding (ignored)
    event_type = jax.random.randint(k_ev, (B, Lev), 0, T + 1, dtype=jnp.int32)
    user_type = jnp.zeros((B,), dtype=jnp.int32)   # unused in forward

    # Deterministic xavier_normal_-style init of the 4 linear weights.
    w1 = _xavier_normal(k1, T, D)
    w2 = _xavier_normal(k2, T, D)
    w3 = _xavier_normal(k3, T, D)
    w4 = _xavier_normal(k4, T, D)
    # a, b, c, d parameters, all initialized to 1.0 (float32 instead of float64 on TPU).
    abcd = jnp.ones((4,), dtype=jnp.float32)

    out, tgt = predictor_forward(enc_output, event_type, user_type,
                                 w1, w2, w3, w4, abcd)
    jax.block_until_ready((out, tgt))

    out_ref, tgt_ref = _reference(enc_output, event_type, w1, w2, w3, w4, abcd)
    assert out.shape == (B, T) and tgt.shape == (B, T)
    # Tolerance loosened slightly vs. the exact-divide reference because the
    # kernel uses the EUP approximate reciprocal (~2^-12 relative error).
    assert jnp.allclose(out, out_ref, atol=2e-3, rtol=2e-3), "out mismatch"
    assert jnp.allclose(tgt, tgt_ref), "target mismatch"

    print("KERNEL_OK")
</pallas_src>

<mosaic_0001>
module attributes {stable_mosaic.version = 11 : i64} {
  func.func @_predictor_kernel(%arg0: i32, %arg1: i32, %arg2: memref<4xf32, #tpu.memory_space<smem>>, %arg3: memref<2x8x32xf32, #tpu.memory_space<vmem>>, %arg4: memref<32x512xf32, #tpu.memory_space<vmem>>, %arg5: memref<2x128xf32, #tpu.memory_space<vmem>>, %arg6: memref<2x32xf32, #tpu.memory_space<vmem>>) attributes {dimension_semantics = [#tpu.dimension_semantics<parallel>, #tpu.dimension_semantics<arbitrary>], iteration_bounds = array<i64: 1, 1>, scalar_prefetch = 0 : i64, scratch_operands = 1 : i64, tpu.core_type = #tpu.core_type<tc>, window_params = [{transform_indices = @transform_0, window_bounds = array<i64: 4>}, {transform_indices = @transform_1, window_bounds = array<i64: 2, 8, 32>}, {pipeline_mode = #tpu.pipeline_mode<synchronous>, transform_indices = @transform_2, window_bounds = array<i64: 32, 512>}, {transform_indices = @transform_3, window_bounds = array<i64: 2, 128>}]} {
    %c0_i32 = arith.constant 0 : i32
    %0 = arith.cmpi eq, %arg1, %c0_i32 : i32
    %1 = arith.extui %0 : i1 to i32
    %c0_i32_0 = arith.constant 0 : i32
    %2 = arith.cmpi ne, %1, %c0_i32_0 : i32
    scf.if %2 {
      %cst_9 = arith.constant 0.000000e+00 : f32
      %11 = vector.broadcast %cst_9 : f32 to vector<2x32xf32>
      %c0_10 = arith.constant 0 : index
      %c0_11 = arith.constant 0 : index
      %12 = vector.load %arg6[%c0_10, %c0_11] : memref<2x32xf32, #tpu.memory_space<vmem>>, vector<2x32xf32>
      tpu.vector_store %arg6[%c0_10, %c0_11], %11 {strides = array<i32>} : memref<2x32xf32, #tpu.memory_space<vmem>>, vector<2x32xf32>,
    } else {
    }
    %c0 = arith.constant 0 : index
    %c0_1 = arith.constant 0 : index
    %c0_2 = arith.constant 0 : index
    %3 = vector.load %arg3[%c0, %c0_1, %c0_2] : memref<2x8x32xf32, #tpu.memory_space<vmem>>, vector<2x8x32xf32>
    %c0_3 = arith.constant 0 : index
    %c0_4 = arith.constant 0 : index
    %4 = vector.load %arg6[%c0_3, %c0_4] : memref<2x32xf32, #tpu.memory_space<vmem>>, vector<2x32xf32>
    %cst = arith.constant dense<0.000000e+00> : vector<2x32xf32>
    %5 = vector.multi_reduction <add>, %3, %cst [1] : vector<2x8x32xf32> to vector<2x32xf32>
    %6 = arith.addf %4, %5 : vector<2x32xf32>
    %c0_5 = arith.constant 0 : index
    %c0_6 = arith.constant 0 : index
    %7 = vector.load %arg6[%c0_5, %c0_6] : memref<2x32xf32, #tpu.memory_space<vmem>>, vector<2x32xf32>
    tpu.vector_store %arg6[%c0_5, %c0_6], %6 {strides = array<i32>} : memref<2x32xf32, #tpu.memory_space<vmem>>, vector<2x32xf32>,
    %c0_i32_7 = arith.constant 0 : i32
    %8 = arith.cmpi eq, %arg1, %c0_i32_7 : i32
    %9 = arith.extui %8 : i1 to i32
    %c0_i32_8 = arith.constant 0 : i32
    %10 = arith.cmpi ne, %9, %c0_i32_8 : i32
    scf.if %10 {
      %c0_9 = arith.constant 0 : index
      %c0_10 = arith.constant 0 : index
      %11 = vector.load %arg6[%c0_9, %c0_10] : memref<2x32xf32, #tpu.memory_space<vmem>>, vector<2x32xf32>
      %cst_11 = arith.constant 8.000000e+00 : f32
      %12 = vector.broadcast %cst_11 : f32 to vector<2x32xf32>
      %13 = arith.divf %11, %12 : vector<2x32xf32>
      %c0_12 = arith.constant 0 : index
      %c0_13 = arith.constant 0 : index
      %14 = vector.load %arg4[%c0_12, %c0_13] : memref<32x512xf32, #tpu.memory_space<vmem>>, vector<32x512xf32>
      %cst_14 = arith.constant dense<0.000000e+00> : vector<2x512xf32>
      %15 = tpu.matmul %13, %14, %cst_14 {dimension_numbers = #tpu.dot_dimension_numbers<[1], [0], [0], [1], [0, 0, 1, 1], [], []>} : vector<2x32xf32>, vector<32x512xf32>, vector<2x512xf32> -> vector<2x512xf32>
      %cst_15 = arith.constant 0.000000e+00 : f32
      %16 = vector.broadcast %cst_15 : f32 to vector<2x128xf32>
      %17 = vector.extract_strided_slice %15 {offsets = [0, 0], sizes = [2, 128], strides = [1, 1]} : vector<2x512xf32> to vector<2x128xf32>
      %18 = arith.mulf %17, %17 : vector<2x128xf32>
      %cst_16 = arith.constant dense<0.000000e+00> : vector<2xf32>
      %19 = vector.multi_reduction <add>, %18, %cst_16 [1] : vector<2x128xf32> to vector<2xf32>
      %20 = vector.shape_cast %19 : vector<2xf32> to vector<2x1xf32>
      %21 = math.sqrt %20 : vector<2x1xf32>
      %cst_17 = arith.constant 9.99999974E-6 : f32
      %22 = vector.broadcast %cst_17 : f32 to vector<2x1xf32>
      %23 = arith.maximumf %21, %22 : vector<2x1xf32>
      %24 = tpu.reciprocal %23 {approx = true} : vector<2x1xf32> -> vector<2x1xf32>
      %c0_18 = arith.constant 0 : index
      %25 = memref.load %arg2[%c0_18] : memref<4xf32, #tpu.memory_space<smem>>
      %26 = vector.broadcast %24 : vector<2x1xf32> to vector<2x128xf32>
      %27 = arith.mulf %17, %26 : vector<2x128xf32>
      %28 = vector.broadcast %25 : f32 to vector<2x128xf32>
      %29 = arith.mulf %28, %27 : vector<2x128xf32>
      %30 = arith.addf %16, %29 : vector<2x128xf32>
      %31 = vector.extract_strided_slice %15 {offsets = [0, 128], sizes = [2, 128], strides = [1, 1]} : vector<2x512xf32> to vector<2x128xf32>
      %32 = arith.mulf %31, %31 : vector<2x128xf32>
      %cst_19 = arith.constant dense<0.000000e+00> : vector<2xf32>
      %33 = vector.multi_reduction <add>, %32, %cst_19 [1] : vector<2x128xf32> to vector<2xf32>
      %34 = vector.shape_cast %33 : vector<2xf32> to vector<2x1xf32>
      %35 = math.sqrt %34 : vector<2x1xf32>
      %cst_20 = arith.constant 9.99999974E-6 : f32
      %36 = vector.broadcast %cst_20 : f32 to vector<2x1xf32>
      %37 = arith.maximumf %35, %36 : vector<2x1xf32>
      %38 = tpu.reciprocal %37 {approx = true} : vector<2x1xf32> -> vector<2x1xf32>
      %c1 = arith.constant 1 : index
      %39 = memref.load %arg2[%c1] : memref<4xf32, #tpu.memory_space<smem>>
      %40 = vector.broadcast %38 : vector<2x1xf32> to vector<2x128xf32>
      %41 = arith.mulf %31, %40 : vector<2x128xf32>
      %42 = vector.broadcast %39 : f32 to vector<2x128xf32>
      %43 = arith.mulf %42, %41 : vector<2x128xf32>
      %44 = arith.addf %30, %43 : vector<2x128xf32>
      %45 = vector.extract_strided_slice %15 {offsets = [0, 256], sizes = [2, 128], strides = [1, 1]} : vector<2x512xf32> to vector<2x128xf32>
      %46 = arith.mulf %45, %45 : vector<2x128xf32>
      %cst_21 = arith.constant dense<0.000000e+00> : vector<2xf32>
      %47 = vector.multi_reduction <add>, %46, %cst_21 [1] : vector<2x128xf32> to vector<2xf32>
      %48 = vector.shape_cast %47 : vector<2xf32> to vector<2x1xf32>
      %49 = math.sqrt %48 : vector<2x1xf32>
      %cst_22 = arith.constant 9.99999974E-6 : f32
      %50 = vector.broadcast %cst_22 : f32 to vector<2x1xf32>
      %51 = arith.maximumf %49, %50 : vector<2x1xf32>
      %52 = tpu.reciprocal %51 {approx = true} : vector<2x1xf32> -> vector<2x1xf32>
      %c2 = arith.constant 2 : index
      %53 = memref.load %arg2[%c2] : memref<4xf32, #tpu.memory_space<smem>>
      %54 = vector.broadcast %52 : vector<2x1xf32> to vector<2x128xf32>
      %55 = arith.mulf %45, %54 : vector<2x128xf32>
      %56 = vector.broadcast %53 : f32 to vector<2x128xf32>
      %57 = arith.mulf %56, %55 : vector<2x128xf32>
      %58 = arith.addf %44, %57 : vector<2x128xf32>
      %59 = vector.extract_strided_slice %15 {offsets = [0, 384], sizes = [2, 128], strides = [1, 1]} : vector<2x512xf32> to vector<2x128xf32>
      %60 = arith.mulf %59, %59 : vector<2x128xf32>
      %cst_23 = arith.constant dense<0.000000e+00> : vector<2xf32>
      %61 = vector.multi_reduction <add>, %60, %cst_23 [1] : vector<2x128xf32> to vector<2xf32>
      %62 = vector.shape_cast %61 : vector<2xf32> to vector<2x1xf32>
      %63 = math.sqrt %62 : vector<2x1xf32>
      %cst_24 = arith.constant 9.99999974E-6 : f32
      %64 = vector.broadcast %cst_24 : f32 to vector<2x1xf32>
      %65 = arith.maximumf %63, %64 : vector<2x1xf32>
      %66 = tpu.reciprocal %65 {approx = true} : vector<2x1xf32> -> vector<2x1xf32>
      %c3 = arith.constant 3 : index
      %67 = memref.load %arg2[%c3] : memref<4xf32, #tpu.memory_space<smem>>
      %68 = vector.broadcast %66 : vector<2x1xf32> to vector<2x128xf32>
      %69 = arith.mulf %59, %68 : vector<2x128xf32>
      %70 = vector.broadcast %67 : f32 to vector<2x128xf32>
      %71 = arith.mulf %70, %69 : vector<2x128xf32>
      %72 = arith.addf %58, %71 : vector<2x128xf32>
      %73 = math.tanh %72 : vector<2x128xf32>
      %c0_25 = arith.constant 0 : index
      %c0_26 = arith.constant 0 : index
      %74 = vector.load %arg5[%c0_25, %c0_26] : memref<2x128xf32, #tpu.memory_space<vmem>>, vector<2x128xf32>
      tpu.vector_store %arg5[%c0_25, %c0_26], %73 {strides = array<i32>} : memref<2x128xf32, #tpu.memory_space<vmem>>, vector<2x128xf32>,
    } else {
    }
    return
  }
  func.func @transform_0(%arg0: i32, %arg1: i32) -> i32 {
    %c0_i32 = arith.constant 0 : i32
    %c0_i32_0 = arith.constant 0 : i32
    return %c0_i32 : i32
  }
  func.func @transform_1(%arg0: i32, %arg1: i32) -> (i32, i32, i32) {
    %c0_i32 = arith.constant 0 : i32
    %c0_i32_0 = arith.constant 0 : i32
    return %arg0, %arg1, %c0_i32 : i32, i32, i32
  }
  func.func @transform_2(%arg0: i32, %arg1: i32) -> (i32, i32) {
    %c0_i32 = arith.constant 0 : i32
    %c0_i32_0 = arith.constant 0 : i32
    %c0_i32_1 = arith.constant 0 : i32
    return %c0_i32, %c0_i32_0 : i32, i32
  }
  func.func @transform_3(%arg0: i32, %arg1: i32) -> (i32, i32) {
    %c0_i32 = arith.constant 0 : i32
    %c0_i32_0 = arith.constant 0 : i32
    return %arg0, %c0_i32 : i32, i32
  }
}

module attributes {stable_mosaic.version = 11 : i64} {
  func.func @_predictor_kernel(%arg0: i32, %arg1: i32, %arg2: memref<4xf32, #tpu.memory_space<smem>>, %arg3: memref<2x8x32xf32, #tpu.memory_space<vmem>>, %arg4: memref<32x512xf32, #tpu.memory_space<vmem>>, %arg5: memref<2x128xf32, #tpu.memory_space<vmem>>, %arg6: memref<2x32xf32, #tpu.memory_space<vmem>>) attributes {dimension_semantics = [#tpu.dimension_semantics<parallel>, #tpu.dimension_semantics<arbitrary>], iteration_bounds = array<i64: 1, 1>, scalar_prefetch = 0 : i64, scratch_operands = 1 : i64, tpu.core_type = #tpu.core_type<tc>, window_params = [{transform_indices = @transform_0, window_bounds = array<i64: 4>}, {transform_indices = @transform_1, window_bounds = array<i64: 2, 8, 32>}, {pipeline_mode = #tpu.pipeline_mode<synchronous>, transform_indices = @transform_2, window_bounds = array<i64: 32, 512>}, {transform_indices = @transform_3, window_bounds = array<i64: 2, 128>}]} {
    %c0_i32 = arith.constant 0 : i32
    %0 = arith.cmpi eq, %arg1, %c0_i32 : i32
    %1 = arith.extui %0 : i1 to i32
    %c0_i32_0 = arith.constant 0 : i32
    %2 = arith.cmpi ne, %1, %c0_i32_0 : i32
    scf.if %2 {
      %cst_9 = arith.constant 0.000000e+00 : f32
      %11 = vector.broadcast %cst_9 : f32 to vector<2x32xf32>
      %c0_10 = arith.constant 0 : index
      %c0_11 = arith.constant 0 : index
      %12 = vector.load %arg6[%c0_10, %c0_11] : memref<2x32xf32, #tpu.memory_space<vmem>>, vector<2x32xf32>
      tpu.vector_store %arg6[%c0_10, %c0_11], %11 {strides = array<i32>} : memref<2x32xf32, #tpu.memory_space<vmem>>, vector<2x32xf32>,
    } else {
    }
    %c0 = arith.constant 0 : index
    %c0_1 = arith.constant 0 : index
    %c0_2 = arith.constant 0 : index
    %3 = vector.load %arg3[%c0, %c0_1, %c0_2] : memref<2x8x32xf32, #tpu.memory_space<vmem>>, vector<2x8x32xf32>
    %c0_3 = arith.constant 0 : index
    %c0_4 = arith.constant 0 : index
    %4 = vector.load %arg6[%c0_3, %c0_4] : memref<2x32xf32, #tpu.memory_space<vmem>>, vector<2x32xf32>
    %cst = arith.constant dense<0.000000e+00> : vector<2x32xf32>
    %5 = vector.multi_reduction <add>, %3, %cst [1] : vector<2x8x32xf32> to vector<2x32xf32>
    %6 = arith.addf %4, %5 : vector<2x32xf32>
    %c0_5 = arith.constant 0 : index
    %c0_6 = arith.constant 0 : index
    %7 = vector.load %arg6[%c0_5, %c0_6] : memref<2x32xf32, #tpu.memory_space<vmem>>, vector<2x32xf32>
    tpu.vector_store %arg6[%c0_5, %c0_6], %6 {strides = array<i32>} : memref<2x32xf32, #tpu.memory_space<vmem>>, vector<2x32xf32>,
    %c0_i32_7 = arith.constant 0 : i32
    %8 = arith.cmpi eq, %arg1, %c0_i32_7 : i32
    %9 = arith.extui %8 : i1 to i32
    %c0_i32_8 = arith.constant 0 : i32
    %10 = arith.cmpi ne, %9, %c0_i32_8 : i32
    scf.if %10 {
      %c0_9 = arith.constant 0 : index
      %c0_10 = arith.constant 0 : index
      %11 = vector.load %arg6[%c0_9, %c0_10] : memref<2x32xf32, #tpu.memory_space<vmem>>, vector<2x32xf32>
      %cst_11 = arith.constant 8.000000e+00 : f32
      %12 = vector.broadcast %cst_11 : f32 to vector<2x32xf32>
      %13 = arith.divf %11, %12 : vector<2x32xf32>
      %c0_12 = arith.constant 0 : index
      %c0_13 = arith.constant 0 : index
      %14 = vector.load %arg4[%c0_12, %c0_13] : memref<32x512xf32, #tpu.memory_space<vmem>>, vector<32x512xf32>
      %cst_14 = arith.constant dense<0.000000e+00> : vector<2x512xf32>
      %15 = tpu.matmul %13, %14, %cst_14 {dimension_numbers = #tpu.dot_dimension_numbers<[1], [0], [0], [1], [0, 0, 1, 1], [], []>} : vector<2x32xf32>, vector<32x512xf32>, vector<2x512xf32> -> vector<2x512xf32>
      %cst_15 = arith.constant 0.000000e+00 : f32
      %16 = vector.broadcast %cst_15 : f32 to vector<2x128xf32>
      %17 = vector.extract_strided_slice %15 {offsets = [0, 0], sizes = [2, 128], strides = [1, 1]} : vector<2x512xf32> to vector<2x128xf32>
      %18 = arith.mulf %17, %17 : vector<2x128xf32>
      %cst_16 = arith.constant dense<0.000000e+00> : vector<2xf32>
      %19 = vector.multi_reduction <add>, %18, %cst_16 [1] : vector<2x128xf32> to vector<2xf32>
      %20 = vector.shape_cast %19 : vector<2xf32> to vector<2x1xf32>
      %21 = math.sqrt %20 : vector<2x1xf32>
      %cst_17 = arith.constant 9.99999974E-6 : f32
      %22 = vector.broadcast %cst_17 : f32 to vector<2x1xf32>
      %23 = arith.maximumf %21, %22 : vector<2x1xf32>
      %24 = tpu.reciprocal %23 {approx = true} : vector<2x1xf32> -> vector<2x1xf32>
      %c0_18 = arith.constant 0 : index
      %25 = memref.load %arg2[%c0_18] : memref<4xf32, #tpu.memory_space<smem>>
      %26 = vector.broadcast %24 : vector<2x1xf32> to vector<2x128xf32>
      %27 = arith.mulf %17, %26 : vector<2x128xf32>
      %28 = vector.broadcast %25 : f32 to vector<2x128xf32>
      %29 = arith.mulf %28, %27 : vector<2x128xf32>
      %30 = arith.addf %16, %29 : vector<2x128xf32>
      %31 = vector.extract_strided_slice %15 {offsets = [0, 128], sizes = [2, 128], strides = [1, 1]} : vector<2x512xf32> to vector<2x128xf32>
      %32 = arith.mulf %31, %31 : vector<2x128xf32>
      %cst_19 = arith.constant dense<0.000000e+00> : vector<2xf32>
      %33 = vector.multi_reduction <add>, %32, %cst_19 [1] : vector<2x128xf32> to vector<2xf32>
      %34 = vector.shape_cast %33 : vector<2xf32> to vector<2x1xf32>
      %35 = math.sqrt %34 : vector<2x1xf32>
      %cst_20 = arith.constant 9.99999974E-6 : f32
      %36 = vector.broadcast %cst_20 : f32 to vector<2x1xf32>
      %37 = arith.maximumf %35, %36 : vector<2x1xf32>
      %38 = tpu.reciprocal %37 {approx = true} : vector<2x1xf32> -> vector<2x1xf32>
      %c1 = arith.constant 1 : index
      %39 = memref.load %arg2[%c1] : memref<4xf32, #tpu.memory_space<smem>>
      %40 = vector.broadcast %38 : vector<2x1xf32> to vector<2x128xf32>
      %41 = arith.mulf %31, %40 : vector<2x128xf32>
      %42 = vector.broadcast %39 : f32 to vector<2x128xf32>
      %43 = arith.mulf %42, %41 : vector<2x128xf32>
      %44 = arith.addf %30, %43 : vector<2x128xf32>
      %45 = vector.extract_strided_slice %15 {offsets = [0, 256], sizes = [2, 128], strides = [1, 1]} : vector<2x512xf32> to vector<2x128xf32>
      %46 = arith.mulf %45, %45 : vector<2x128xf32>
      %cst_21 = arith.constant dense<0.000000e+00> : vector<2xf32>
      %47 = vector.multi_reduction <add>, %46, %cst_21 [1] : vector<2x128xf32> to vector<2xf32>
      %48 = vector.shape_cast %47 : vector<2xf32> to vector<2x1xf32>
      %49 = math.sqrt %48 : vector<2x1xf32>
      %cst_22 = arith.constant 9.99999974E-6 : f32
      %50 = vector.broadcast %cst_22 : f32 to vector<2x1xf32>
      %51 = arith.maximumf %49, %50 : vector<2x1xf32>
      %52 = tpu.reciprocal %51 {approx = true} : vector<2x1xf32> -> vector<2x1xf32>
      %c2 = arith.constant 2 : index
      %53 = memref.load %arg2[%c2] : memref<4xf32, #tpu.memory_space<smem>>
      %54 = vector.broadcast %52 : vector<2x1xf32> to vector<2x128xf32>
      %55 = arith.mulf %45, %54 : vector<2x128xf32>
      %56 = vector.broadcast %53 : f32 to vector<2x128xf32>
      %57 = arith.mulf %56, %55 : vector<2x128xf32>
      %58 = arith.addf %44, %57 : vector<2x128xf32>
      %59 = vector.extract_strided_slice %15 {offsets = [0, 384], sizes = [2, 128], strides = [1, 1]} : vector<2x512xf32> to vector<2x128xf32>
      %60 = arith.mulf %59, %59 : vector<2x128xf32>
      %cst_23 = arith.constant dense<0.000000e+00> : vector<2xf32>
      %61 = vector.multi_reduction <add>, %60, %cst_23 [1] : vector<2x128xf32> to vector<2xf32>
      %62 = vector.shape_cast %61 : vector<2xf32> to vector<2x1xf32>
      %63 = math.sqrt %62 : vector<2x1xf32>
      %cst_24 = arith.constant 9.99999974E-6 : f32
      %64 = vector.broadcast %cst_24 : f32 to vector<2x1xf32>
      %65 = arith.maximumf %63, %64 : vector<2x1xf32>
      %66 = tpu.reciprocal %65 {approx = true} : vector<2x1xf32> -> vector<2x1xf32>
      %c3 = arith.constant 3 : index
      %67 = memref.load %arg2[%c3] : memref<4xf32, #tpu.memory_space<smem>>
      %68 = vector.broadcast %66 : vector<2x1xf32> to vector<2x128xf32>
      %69 = arith.mulf %59, %68 : vector<2x128xf32>
      %70 = vector.broadcast %67 : f32 to vector<2x128xf32>
      %71 = arith.mulf %70, %69 : vector<2x128xf32>
      %72 = arith.addf %58, %71 : vector<2x128xf32>
      %73 = math.tanh %72 : vector<2x128xf32>
      %c0_25 = arith.constant 0 : index
      %c0_26 = arith.constant 0 : index
      %74 = vector.load %arg5[%c0_25, %c0_26] : memref<2x128xf32, #tpu.memory_space<vmem>>, vector<2x128xf32>
      tpu.vector_store %arg5[%c0_25, %c0_26], %73 {strides = array<i32>} : memref<2x128xf32, #tpu.memory_space<vmem>>, vector<2x128xf32>,
    } else {
    }
    return
  }
  func.func @transform_0(%arg0: i32, %arg1: i32) -> i32 {
    %c0_i32 = arith.constant 0 : i32
    %c0_i32_0 = arith.constant 0 : i32
    return %c0_i32 : i32
  }
  func.func @transform_1(%arg0: i32, %arg1: i32) -> (i32, i32, i32) {
    %c0_i32 = arith.constant 0 : i32
    %c0_i32_0 = arith.constant 0 : i32
    return %arg0, %arg1, %c0_i32 : i32, i32, i32
  }
  func.func @transform_2(%arg0: i32, %arg1: i32) -> (i32, i32) {
    %c0_i32 = arith.constant 0 : i32
    %c0_i32_0 = arith.constant 0 : i32
    %c0_i32_1 = arith.constant 0 : i32
    return %c0_i32, %c0_i32_0 : i32, i32
  }
  func.func @transform_3(%arg0: i32, %arg1: i32) -> (i32, i32) {
    %c0_i32 = arith.constant 0 : i32
    %c0_i32_0 = arith.constant 0 : i32
    return %arg0, %c0_i32 : i32, i32
  }
}

</mosaic_0001>

<llo_original>
// kernel: _forward_impl.1
$region0: #{_forward_impl.1}
  #allocation0 [shape = 'u32[]', space=smem, size = 0x4, offset = 0x4, fixed_abs, tag = 'smem constant byte address 0x4 - core index']
  #allocation1 [shape = 'u32[144,128]{1,0:T(1,128)}', space=vmem, size = 0x12000, scoped, tag = 'internal scratch']
  #allocation2 [shape = 'f32[2,32]{1,0:T(2,128)}', space=vmem, size = 0x400, scoped, tag = 'scratch operand']
  %s0 = inlined_call_operand.vmem [shape: f32[4], index: 0, kind: input, shape index: {}]
  %s1 = inlined_call_operand.vmem [shape: f32[2,8,32], index: 1, kind: input, shape index: {}]
  %s2 = inlined_call_operand.vmem [shape: f32[32,512], index: 2, kind: input, shape index: {}]
  %s3 = inlined_call_operand.hbm [shape: f32[2,128], index: 3, kind: output, shape index: {}]
  %s4 = sld [smem:[#allocation0]]
  $region34: #{_forward_impl.1} parent=0
    _
  %s6 = ssub.s32 1, %s4
  %s7 = scalar_select 0, %s6, %s4
  $region1: #{_forward_impl.1} parent=0
    #allocation3 [shape = 'u8[512]{0}', space=smem, size = 0x200, scoped, tag = 'input window, operand 0, single buffered']
    #allocation4 [shape = 's32[1]{0}', space=sflag, size = 0x4, scoped, tag = 'scoped memory for _forward_impl.1']
    #allocation5 [shape = 's32[1]{0}', space=sflag, size = 0x4, scoped, tag = 'scoped memory for _forward_impl.1']
    #allocation6 [shape = 'u8[1024]{0}', space=vmem, size = 0x400, scoped, tag = 'output window, operand 0, single buffered']
    %8 = vsyncpa [#allocation5], 0
    %9 = vsyncpa [#allocation4], 0
    // Predicated region
    $region2: #{_forward_impl.1} parent=1 // pred_check
      _
    $region3: #{_forward_impl.1} parent=1 // pred_check_branch
      %11 = sbr.rel (0) target = $region5
    $region4: #{_forward_impl.1} parent=1 // pred_region
      %s13 = ssub.s32 16, 16
      %14 = vsyncadd [#allocation5], %s13
      %s16 = sshll.u32 %s0, 4
      %s17 = int_to_ptr.vmem [resolvable:$true] %s16
      %19 = dma.vmem_to_smem %s17, 16, [#allocation3], [#allocation5]
    $region5: #{_forward_impl.1} parent=1 // pred_fallthru
      _
    // Predicated region
    $region6: #{_forward_impl.1} parent=1 // pred_check
      _
    $region7: #{_forward_impl.1} parent=1 // pred_check_branch
      %21 = sbr.rel (0) target = $region9
    $region8: #{_forward_impl.1} parent=1 // pred_region
      _
    $region9: #{_forward_impl.1} parent=1 // pred_fallthru
      _
    // Predicated region
    $region10: #{_forward_impl.1} parent=1 // pred_check
      _
    $region11: #{_forward_impl.1} parent=1 // pred_check_branch
      %23 = sbr.rel (0) target = $region13
    $region12: #{_forward_impl.1} parent=1 // pred_region
      _
    $region13: #{_forward_impl.1} parent=1 // pred_fallthru
      _
    // Predicated region
    $region14: #{_forward_impl.1} parent=1 // pred_check
      _
    $region15: #{_forward_impl.1} parent=1 // pred_check_branch
      %25 = sbr.rel (0) target = $region17
    $region16: #{_forward_impl.1} parent=1 // pred_region
      %26 = dma.done [#allocation5], 16
    $region17: #{_forward_impl.1} parent=1 // pred_fallthru
      _
    %27 = sfence
    %p28 = scmp.eq.s32.totalorder 0, 0
    // Predicated region
    $region18: #{_forward_impl.1} parent=1 // pred_check
      %p29 = pneg %p28
    $region19: #{_forward_impl.1} parent=1 // pred_check_branch
      %31 = sbr.rel (%p29) target = $region21
    $region20: #{_forward_impl.1} parent=1 // pred_region
      %vm32 = vcmask 254976
      %33 = vst.msk [vmem:[#allocation2] sm:$0x3] %vm32, 0.0
    $region21: #{_forward_impl.1} parent=1 // pred_fallthru
      _
    %v34 = vld [vmem:[%s1] sm:$0xff]
    %v35 = vld [vmem:[%s1 + $0x8] sm:$0xff]
    %v36 = vld [vmem:[#allocation2] sm:$0x3]
    %vm37 = vcmask 261120
    %v38 = vsel %vm37, %v34, 0.0
    %v39 = vrot.slane %v38, 4
    %v40 = vadd.f32 %v38, %v39
    %v41 = vrot.slane %v40, 2
    %v42 = vadd.f32 %v40, %v41
    %v43 = vrot.slane %v42, 1
    %v44 = vadd.f32 %v42, %v43
    %v45 = vsel %vm37, %v35, 0.0
    %v46 = vrot.slane %v45, 4
    %v47 = vadd.f32 %v45, %v46
    %v48 = vrot.slane %v47, 2
    %v49 = vadd.f32 %v47, %v48
    %v50 = vrot.slane %v49, 1
    %v51 = vadd.f32 %v49, %v50
    %vm54 = vcmask 1041409
    %v55 = vsel %vm54, %v51, %v44
    %v57 = vadd.f32 %v36, %v55
    %vm58 = vcmask 254976
    %59 = vst.msk [vmem:[#allocation2] sm:$0x3] %vm58, %v57
    // Predicated region
    $region22: #{_forward_impl.1} parent=1 // pred_check
      %p60 = pneg %p28
    $region23: #{_forward_impl.1} parent=1 // pred_check_branch
      %62 = sbr.rel (%p60) target = $region25
    $region24: #{_forward_impl.1} parent=1 // pred_region
      %v63 = vld [vmem:[#allocation2] sm:$0x3]
      %v64 = vrcp.pop 8.0
      %v65 = vmul.f32 %v63, %v64
      %v66 = vld [vmem:[%s2] sm:$0xff]
      %v67 = vld [vmem:[%s2 + $0x8] sm:$0xff]
      %v68 = vld [vmem:[%s2 + $0x10] sm:$0xff]
      %v69 = vld [vmem:[%s2 + $0x18] sm:$0xff]
      %v70 = vld [vmem:[%s2 + $0x20] sm:$0xff]
      %v71 = vld [vmem:[%s2 + $0x28] sm:$0xff]
      %v72 = vld [vmem:[%s2 + $0x30] sm:$0xff]
      %v73 = vld [vmem:[%s2 + $0x38] sm:$0xff]
      %v74 = vld [vmem:[%s2 + $0x40] sm:$0xff]
      %v75 = vld [vmem:[%s2 + $0x48] sm:$0xff]
      %v76 = vld [vmem:[%s2 + $0x50] sm:$0xff]
      %v77 = vld [vmem:[%s2 + $0x58] sm:$0xff]
      %v78 = vld [vmem:[%s2 + $0x60] sm:$0xff]
      %v79 = vld [vmem:[%s2 + $0x68] sm:$0xff]
      %v80 = vld [vmem:[%s2 + $0x70] sm:$0xff]
      %v81 = vld [vmem:[%s2 + $0x78] sm:$0xff]
      %v83 = vsel %vm37, %v65, 0
      %85 = vmatprep.subr.mxu0 %v67
      %86 = vmatpush1.msra.mxu0 %v66
      %87 = vmatprep.subr.mxu0 %v71
      %88 = vmatpush1.msra.mxu0 %v70
      %89 = vmatprep.subr.mxu0 %v75
      %90 = vmatpush1.msra.mxu0 %v74
      %91 = vmatprep.subr.mxu0 %v79
      %92 = vmatpush1.msra.mxu0 %v78
      %93 = vmatprep.subr.mxu0 0.0
      %94 = vmatpush1.msra.mxu0 0.0
      %95 = vmatprep.subr.mxu0 0.0
      %96 = vmatpush1.msra.mxu0 0.0
      %97 = vmatprep.subr.mxu0 0.0
      %98 = vmatpush1.msra.mxu0 0.0
      %99 = vmatprep.subr.mxu0 0.0
      %100 = vmatpush1.msra.mxu0 0.0
      %101 = vmatprep.subr.mxu0 0.0
      %102 = vmatpush1.msra.mxu0 0.0
      %103 = vmatprep.subr.mxu0 0.0
      %104 = vmatpush1.msra.mxu0 0.0
      %105 = vmatprep.subr.mxu0 0.0
      %106 = vmatpush1.msra.mxu0 0.0
      %107 = vmatprep.subr.mxu0 0.0
      %108 = vmatpush1.msra.mxu0 0.0
      %109 = vmatprep.subr.mxu0 0.0
      %110 = vmatpush1.msra.mxu0 0.0
      %111 = vmatprep.subr.mxu0 0.0
      %112 = vmatpush1.msra.mxu0 0.0
      %113 = vmatprep.subr.mxu0 0.0
      %114 = vmatpush1.msra.mxu0 0.0
      %115 = vmatprep.subr.mxu0 0.0
      %116 = vmatpush1.msra.mxu0 0.0
      %117 = vmatprep.subr.mxu0 0.0
      %118 = vmatpush1.msra.mxu0 0.0
      %119 = vmatprep.subr.mxu0 0.0
      %120 = vmatpush1.msra.mxu0 0.0
      %121 = vmatprep.subr.mxu0 0.0
      %122 = vmatpush1.msra.mxu0 0.0
      %123 = vmatprep.subr.mxu0 0.0
      %124 = vmatpush1.msra.mxu0 0.0
      %125 = vmatprep.subr.mxu0 0.0
      %126 = vmatpush1.msra.mxu0 0.0
      %127 = vmatprep.subr.mxu0 0.0
      %128 = vmatpush1.msra.mxu0 0.0
      %129 = vmatprep.subr.mxu0 0.0
      %130 = vmatpush1.msra.mxu0 0.0
      %131 = vmatprep.subr.mxu0 0.0
      %132 = vmatpush1.msra.mxu0 0.0
      %133 = vmatprep.subr.mxu0 0.0
      %134 = vmatpush1.msra.mxu0 0.0
      %135 = vmatprep.subr.mxu0 0.0
      %136 = vmatpush1.msra.mxu0 0.0
      %137 = vmatprep.subr.mxu0 0.0
      %138 = vmatpush1.msra.mxu0 0.0
      %139 = vmatprep.subr.mxu0 0.0
      %140 = vmatpush1.msra.mxu0 0.0
      %141 = vmatprep.subr.mxu0 0.0
      %142 = vmatpush1.msra.mxu0 0.0
      %143 = vmatprep.subr.mxu0 0.0
      %144 = vmatpush1.msra.mxu0 0.0
      %145 = vmatprep.subr.mxu0 0.0
      %146 = vmatpush1.msra.mxu0 0.0
      %147 = vmatprep.subr.mxu0 0.0
      %148 = vmatpush1.msra.mxu0 0.0
      %149 = vmatprep.mubr.f32.mxu0 0.0
      %150 = vmatmul.mubr.f32.gmra.mrb[0].mxu0 %v83
      %v151 = vpop.f32.mrb[0].mxu0
      %v152 = vadd.f32 0.0, %v151
      %v153 = vpop.f32.mrb[0].mxu0
      %v154 = vadd.f32 0.0, %v153
      %155 = vdwg.mxu0
      %156 = vmatprep.subr.mxu0 %v69
      %157 = vmatpush1.msra.mxu0 %v68
      %158 = vmatprep.subr.mxu0 %v73
      %159 = vmatpush1.msra.mxu0 %v72
      %160 = vmatprep.subr.mxu0 %v77
      %161 = vmatpush1.msra.mxu0 %v76
      %162 = vmatprep.subr.mxu0 %v81
      %163 = vmatpush1.msra.mxu0 %v80
      %164 = vmatprep.subr.mxu0 0.0
      %165 = vmatpush1.msra.mxu0 0.0
      %166 = vmatprep.subr.mxu0 0.0
      %167 = vmatpush1.msra.mxu0 0.0
      %168 = vmatprep.subr.mxu0 0.0
      %169 = vmatpush1.msra.mxu0 0.0
      %170 = vmatprep.subr.mxu0 0.0
      %171 = vmatpush1.msra.mxu0 0.0
      %172 = vmatprep.subr.mxu0 0.0
      %173 = vmatpush1.msra.mxu0 0.0
      %174 = vmatprep.subr.mxu0 0.0
      %175 = vmatpush1.msra.mxu0 0.0
      %176 = vmatprep.subr.mxu0 0.0
      %177 = vmatpush1.msra.mxu0 0.0
      %178 = vmatprep.subr.mxu0 0.0
      %179 = vmatpush1.msra.mxu0 0.0
      %180 = vmatprep.subr.mxu0 0.0
      %181 = vmatpush1.msra.mxu0 0.0
      %182 = vmatprep.subr.mxu0 0.0
      %183 = vmatpush1.msra.mxu0 0.0
      %184 = vmatprep.subr.mxu0 0.0
      %185 = vmatpush1.msra.mxu0 0.0
      %186 = vmatprep.subr.mxu0 0.0
      %187 = vmatpush1.msra.mxu0 0.0
      %188 = vmatprep.subr.mxu0 0.0
      %189 = vmatpush1.msra.mxu0 0.0
      %190 = vmatprep.subr.mxu0 0.0
      %191 = vmatpush1.msra.mxu0 0.0
      %192 = vmatprep.subr.mxu0 0.0
      %193 = vmatpush1.msra.mxu0 0.0
      %194 = vmatprep.subr.mxu0 0.0
      %195 = vmatpush1.msra.mxu0 0.0
      %196 = vmatprep.subr.mxu0 0.0
      %197 = vmatpush1.msra.mxu0 0.0
      %198 = vmatprep.subr.mxu0 0.0
      %199 = vmatpush1.msra.mxu0 0.0
      %200 = vmatprep.subr.mxu0 0.0
      %201 = vmatpush1.msra.mxu0 0.0
      %202 = vmatprep.subr.mxu0 0.0
      %203 = vmatpush1.msra.mxu0 0.0
      %204 = vmatprep.subr.mxu0 0.0
      %205 = vmatpush1.msra.mxu0 0.0
      %206 = vmatprep.subr.mxu0 0.0
      %207 = vmatpush1.msra.mxu0 0.0
      %208 = vmatprep.subr.mxu0 0.0
      %209 = vmatpush1.msra.mxu0 0.0
      %210 = vmatprep.subr.mxu0 0.0
      %211 = vmatpush1.msra.mxu0 0.0
      %212 = vmatprep.subr.mxu0 0.0
      %213 = vmatpush1.msra.mxu0 0.0
      %214 = vmatprep.subr.mxu0 0.0
      %215 = vmatpush1.msra.mxu0 0.0
      %216 = vmatprep.subr.mxu0 0.0
      %217 = vmatpush1.msra.mxu0 0.0
      %218 = vmatprep.subr.mxu0 0.0
      %219 = vmatpush1.msra.mxu0 0.0
      %220 = vmatprep.mubr.f32.mxu0 0.0
      %221 = vmatmul.mubr.f32.gmra.mrb[0].mxu0 %v83
      %v222 = vpop.f32.mrb[0].mxu0
      %v223 = vadd.f32 0.0, %v222
      %v224 = vpop.f32.mrb[0].mxu0
      %v225 = vadd.f32 0.0, %v224
      %226 = vdwg.mxu0
      %v227 = vmul.f32 %v152, %v152
      %vm228 = vcmask 1041408
      %v229 = vsel %vm228, %v227, 0.0
      %230 = vadd.xlane.f32.xlu0 %v229
      %v231 = vpop.xlane.xlu0 %230
      %v232 = vrsqrt.pop %v231
      %v233 = vmul.f32 %v231, %v232
      %vm234 = vcmp.eq.f32.partialorder %v231, inf
      %v235 = vsel %vm234, %v231, %v233
      %vm236 = vcmp.eq.f32.partialorder %v231, 0.0
      %v237 = vand.u32 %v231, 2147483648
      %v238 = vsel %vm236, %v237, %v235
      %v239 = vmax.f32 %v238, 1e-05
      %v240 = vrcp.pop %v239
      %s241 = sld [smem:[#allocation3]]
      %v242 = vmul.f32 %v152, %v240
      %v243 = vstv %s241
      %v244 = vmul.f32 %v243, %v242
      %v245 = vadd.f32 %v244, 0.0
      %v246 = vmul.f32 %v154, %v154
      %v247 = vsel %vm228, %v246, 0.0
      %248 = vadd.xlane.f32.xlu0 %v247
      %v249 = vpop.xlane.xlu0 %248
      %v250 = vrsqrt.pop %v249
      %v251 = vmul.f32 %v249, %v250
      %vm252 = vcmp.eq.f32.partialorder %v249, inf
      %v253 = vsel %vm252, %v249, %v251
      %vm254 = vcmp.eq.f32.partialorder %v249, 0.0
      %v255 = vand.u32 %v249, 2147483648
      %v256 = vsel %vm254, %v255, %v253
      %v257 = vmax.f32 %v256, 1e-05
      %v258 = vrcp.pop %v257
      %s259 = sld [smem:[#allocation3 + $0x1]]
      %v260 = vmul.f32 %v154, %v258
      %v261 = vstv %s259
      %v262 = vmul.f32 %v261, %v260
      %v263 = vadd.f32 %v245, %v262
      %v264 = vmul.f32 %v223, %v223
      %v265 = vsel %vm228, %v264, 0.0
      %266 = vadd.xlane.f32.xlu0 %v265
      %v267 = vpop.xlane.xlu0 %266
      %v268 = vrsqrt.pop %v267
      %v269 = vmul.f32 %v267, %v268
      %vm270 = vcmp.eq.f32.partialorder %v267, inf
      %v271 = vsel %vm270, %v267, %v269
      %vm272 = vcmp.eq.f32.partialorder %v267, 0.0
      %v273 = vand.u32 %v267, 2147483648
      %v274 = vsel %vm272, %v273, %v271
      %v275 = vmax.f32 %v274, 1e-05
      %v276 = vrcp.pop %v275
      %s277 = sld [smem:[#allocation3 + $0x2]]
      %v278 = vmul.f32 %v223, %v276
      %v279 = vstv %s277
      %v280 = vmul.f32 %v279, %v278
      %v281 = vadd.f32 %v263, %v280
      %v282 = vmul.f32 %v225, %v225
      %v283 = vsel %vm228, %v282, 0.0
      %284 = vadd.xlane.f32.xlu0 %v283
      %v285 = vpop.xlane.xlu0 %284
      %v286 = vrsqrt.pop %v285
      %v287 = vmul.f32 %v285, %v286
      %vm288 = vcmp.eq.f32.partialorder %v285, inf
      %v289 = vsel %vm288, %v285, %v287
      %vm290 = vcmp.eq.f32.partialorder %v285, 0.0
      %v291 = vand.u32 %v285, 2147483648
      %v292 = vsel %vm290, %v291, %v289
      %v293 = vmax.f32 %v292, 1e-05
      %v294 = vrcp.pop %v293
      %s295 = sld [smem:[#allocation3 + $0x3]]
      %v296 = vmul.f32 %v225, %v294
      %v297 = vstv %s295
      %v298 = vmul.f32 %v297, %v296
      %v299 = vadd.f32 %v281, %v298
      %v300 = vtanh.pop %v299
      %301 = vst [vmem:[#allocation6] sm:$0x3] %v300
    $region25: #{_forward_impl.1} parent=1 // pred_fallthru
      _
    // Predicated region
    $region26: #{_forward_impl.1} parent=1 // pred_check
      _
    $region27: #{_forward_impl.1} parent=1 // pred_check_branch
      %303 = sbr.rel (0) target = $region29
    $region28: #{_forward_impl.1} parent=1 // pred_region
      %s305 = ssub.s32 32, 32
      %306 = vsyncadd [#allocation4], %s305
      %s308 = sshll.u32 [#allocation6], 4
      %s309 = int_to_ptr.vmem [resolvable:$true] %s308
      %311 = dma.vmem_to_hbm [thread:$0]  %s309, 32, %s3, [#allocation4]
    $region29: #{_forward_impl.1} parent=1 // pred_fallthru
      _
    // Predicated region
    $region30: #{_forward_impl.1} parent=1 // pred_check
      _
    $region31: #{_forward_impl.1} parent=1 // pred_check_branch
      %313 = sbr.rel (0) target = $region33
    $region32: #{_forward_impl.1} parent=1 // pred_region
      %314 = dma.done [#allocation4], 32
    $region33: #{_forward_impl.1} parent=1 // pred_fallthru
      _
    %315 = vsyncpa [#allocation4], 1
    %316 = vsyncpa [#allocation5], 1

// kernel: _forward_impl.1
$region0: #{_forward_impl.1}
  #allocation0 [shape = 'u32[]', space=smem, size = 0x4, offset = 0x4, fixed_abs, tag = 'smem constant byte address 0x4 - core index']
  #allocation1 [shape = 'u32[144,128]{1,0:T(1,128)}', space=vmem, size = 0x12000, scoped, tag = 'internal scratch']
  #allocation2 [shape = 'f32[2,32]{1,0:T(2,128)}', space=vmem, size = 0x400, scoped, tag = 'scratch operand']
  %s0 = inlined_call_operand.vmem [shape: f32[4], index: 0, kind: input, shape index: {}]
  %s1 = inlined_call_operand.vmem [shape: f32[2,8,32], index: 1, kind: input, shape index: {}]
  %s2 = inlined_call_operand.vmem [shape: f32[32,512], index: 2, kind: input, shape index: {}]
  %s3 = inlined_call_operand.hbm [shape: f32[2,128], index: 3, kind: output, shape index: {}]
  %s4 = sld [smem:[#allocation0]]
  $region34: #{_forward_impl.1} parent=0
    _
  %s6 = ssub.s32 1, %s4
  %s7 = scalar_select 0, %s6, %s4
  $region1: #{_forward_impl.1} parent=0
    #allocation3 [shape = 'u8[512]{0}', space=smem, size = 0x200, scoped, tag = 'input window, operand 0, single buffered']
    #allocation4 [shape = 's32[1]{0}', space=sflag, size = 0x4, scoped, tag = 'scoped memory for _forward_impl.1']
    #allocation5 [shape = 's32[1]{0}', space=sflag, size = 0x4, scoped, tag = 'scoped memory for _forward_impl.1']
    #allocation6 [shape = 'u8[1024]{0}', space=vmem, size = 0x400, scoped, tag = 'output window, operand 0, single buffered']
    %8 = vsyncpa [#allocation5], 0
    %9 = vsyncpa [#allocation4], 0
    // Predicated region
    $region2: #{_forward_impl.1} parent=1 // pred_check
      _
    $region3: #{_forward_impl.1} parent=1 // pred_check_branch
      %11 = sbr.rel (0) target = $region5
    $region4: #{_forward_impl.1} parent=1 // pred_region
      %s13 = ssub.s32 16, 16
      %14 = vsyncadd [#allocation5], %s13
      %s16 = sshll.u32 %s0, 4
      %s17 = int_to_ptr.vmem [resolvable:$true] %s16
      %19 = dma.vmem_to_smem %s17, 16, [#allocation3], [#allocation5]
    $region5: #{_forward_impl.1} parent=1 // pred_fallthru
      _
    // Predicated region
    $region6: #{_forward_impl.1} parent=1 // pred_check
      _
    $region7: #{_forward_impl.1} parent=1 // pred_check_branch
      %21 = sbr.rel (0) target = $region9
    $region8: #{_forward_impl.1} parent=1 // pred_region
      _
    $region9: #{_forward_impl.1} parent=1 // pred_fallthru
      _
    // Predicated region
    $region10: #{_forward_impl.1} parent=1 // pred_check
      _
    $region11: #{_forward_impl.1} parent=1 // pred_check_branch
      %23 = sbr.rel (0) target = $region13
    $region12: #{_forward_impl.1} parent=1 // pred_region
      _
    $region13: #{_forward_impl.1} parent=1 // pred_fallthru
      _
    // Predicated region
    $region14: #{_forward_impl.1} parent=1 // pred_check
      _
    $region15: #{_forward_impl.1} parent=1 // pred_check_branch
      %25 = sbr.rel (0) target = $region17
    $region16: #{_forward_impl.1} parent=1 // pred_region
      %26 = dma.done [#allocation5], 16
    $region17: #{_forward_impl.1} parent=1 // pred_fallthru
      _
    %27 = sfence
    %p28 = scmp.eq.s32.totalorder 0, 0
    // Predicated region
    $region18: #{_forward_impl.1} parent=1 // pred_check
      %p29 = pneg %p28
    $region19: #{_forward_impl.1} parent=1 // pred_check_branch
      %31 = sbr.rel (%p29) target = $region21
    $region20: #{_forward_impl.1} parent=1 // pred_region
      %vm32 = vcmask 254976
      %33 = vst.msk [vmem:[#allocation2] sm:$0x3] %vm32, 0.0
    $region21: #{_forward_impl.1} parent=1 // pred_fallthru
      _
    %v34 = vld [vmem:[%s1] sm:$0xff]
    %v35 = vld [vmem:[%s1 + $0x8] sm:$0xff]
    %v36 = vld [vmem:[#allocation2] sm:$0x3]
    %vm37 = vcmask 261120
    %v38 = vsel %vm37, %v34, 0.0
    %v39 = vrot.slane %v38, 4
    %v40 = vadd.f32 %v38, %v39
    %v41 = vrot.slane %v40, 2
    %v42 = vadd.f32 %v40, %v41
    %v43 = vrot.slane %v42, 1
    %v44 = vadd.f32 %v42, %v43
    %v45 = vsel %vm37, %v35, 0.0
    %v46 = vrot.slane %v45, 4
    %v47 = vadd.f32 %v45, %v46
    %v48 = vrot.slane %v47, 2
    %v49 = vadd.f32 %v47, %v48
    %v50 = vrot.slane %v49, 1
    %v51 = vadd.f32 %v49, %v50
    %vm54 = vcmask 1041409
    %v55 = vsel %vm54, %v51, %v44
    %v57 = vadd.f32 %v36, %v55
    %vm58 = vcmask 254976
    %59 = vst.msk [vmem:[#allocation2] sm:$0x3] %vm58, %v57
    // Predicated region
    $region22: #{_forward_impl.1} parent=1 // pred_check
      %p60 = pneg %p28
    $region23: #{_forward_impl.1} parent=1 // pred_check_branch
      %62 = sbr.rel (%p60) target = $region25
    $region24: #{_forward_impl.1} parent=1 // pred_region
      %v63 = vld [vmem:[#allocation2] sm:$0x3]
      %v64 = vrcp.pop 8.0
      %v65 = vmul.f32 %v63, %v64
      %v66 = vld [vmem:[%s2] sm:$0xff]
      %v67 = vld [vmem:[%s2 + $0x8] sm:$0xff]
      %v68 = vld [vmem:[%s2 + $0x10] sm:$0xff]
      %v69 = vld [vmem:[%s2 + $0x18] sm:$0xff]
      %v70 = vld [vmem:[%s2 + $0x20] sm:$0xff]
      %v71 = vld [vmem:[%s2 + $0x28] sm:$0xff]
      %v72 = vld [vmem:[%s2 + $0x30] sm:$0xff]
      %v73 = vld [vmem:[%s2 + $0x38] sm:$0xff]
      %v74 = vld [vmem:[%s2 + $0x40] sm:$0xff]
      %v75 = vld [vmem:[%s2 + $0x48] sm:$0xff]
      %v76 = vld [vmem:[%s2 + $0x50] sm:$0xff]
      %v77 = vld [vmem:[%s2 + $0x58] sm:$0xff]
      %v78 = vld [vmem:[%s2 + $0x60] sm:$0xff]
      %v79 = vld [vmem:[%s2 + $0x68] sm:$0xff]
      %v80 = vld [vmem:[%s2 + $0x70] sm:$0xff]
      %v81 = vld [vmem:[%s2 + $0x78] sm:$0xff]
      %v83 = vsel %vm37, %v65, 0
      %85 = vmatprep.subr.mxu0 %v67
      %86 = vmatpush1.msra.mxu0 %v66
      %87 = vmatprep.subr.mxu0 %v71
      %88 = vmatpush1.msra.mxu0 %v70
      %89 = vmatprep.subr.mxu0 %v75
      %90 = vmatpush1.msra.mxu0 %v74
      %91 = vmatprep.subr.mxu0 %v79
      %92 = vmatpush1.msra.mxu0 %v78
      %93 = vmatprep.subr.mxu0 0.0
      %94 = vmatpush1.msra.mxu0 0.0
      %95 = vmatprep.subr.mxu0 0.0
      %96 = vmatpush1.msra.mxu0 0.0
      %97 = vmatprep.subr.mxu0 0.0
      %98 = vmatpush1.msra.mxu0 0.0
      %99 = vmatprep.subr.mxu0 0.0
      %100 = vmatpush1.msra.mxu0 0.0
      %101 = vmatprep.subr.mxu0 0.0
      %102 = vmatpush1.msra.mxu0 0.0
      %103 = vmatprep.subr.mxu0 0.0
      %104 = vmatpush1.msra.mxu0 0.0
      %105 = vmatprep.subr.mxu0 0.0
      %106 = vmatpush1.msra.mxu0 0.0
      %107 = vmatprep.subr.mxu0 0.0
      %108 = vmatpush1.msra.mxu0 0.0
      %109 = vmatprep.subr.mxu0 0.0
      %110 = vmatpush1.msra.mxu0 0.0
      %111 = vmatprep.subr.mxu0 0.0
      %112 = vmatpush1.msra.mxu0 0.0
      %113 = vmatprep.subr.mxu0 0.0
      %114 = vmatpush1.msra.mxu0 0.0
      %115 = vmatprep.subr.mxu0 0.0
      %116 = vmatpush1.msra.mxu0 0.0
      %117 = vmatprep.subr.mxu0 0.0
      %118 = vmatpush1.msra.mxu0 0.0
      %119 = vmatprep.subr.mxu0 0.0
      %120 = vmatpush1.msra.mxu0 0.0
      %121 = vmatprep.subr.mxu0 0.0
      %122 = vmatpush1.msra.mxu0 0.0
      %123 = vmatprep.subr.mxu0 0.0
      %124 = vmatpush1.msra.mxu0 0.0
      %125 = vmatprep.subr.mxu0 0.0
      %126 = vmatpush1.msra.mxu0 0.0
      %127 = vmatprep.subr.mxu0 0.0
      %128 = vmatpush1.msra.mxu0 0.0
      %129 = vmatprep.subr.mxu0 0.0
      %130 = vmatpush1.msra.mxu0 0.0
      %131 = vmatprep.subr.mxu0 0.0
      %132 = vmatpush1.msra.mxu0 0.0
      %133 = vmatprep.subr.mxu0 0.0
      %134 = vmatpush1.msra.mxu0 0.0
      %135 = vmatprep.subr.mxu0 0.0
      %136 = vmatpush1.msra.mxu0 0.0
      %137 = vmatprep.subr.mxu0 0.0
      %138 = vmatpush1.msra.mxu0 0.0
      %139 = vmatprep.subr.mxu0 0.0
      %140 = vmatpush1.msra.mxu0 0.0
      %141 = vmatprep.subr.mxu0 0.0
      %142 = vmatpush1.msra.mxu0 0.0
      %143 = vmatprep.subr.mxu0 0.0
      %144 = vmatpush1.msra.mxu0 0.0
      %145 = vmatprep.subr.mxu0 0.0
      %146 = vmatpush1.msra.mxu0 0.0
      %147 = vmatprep.subr.mxu0 0.0
      %148 = vmatpush1.msra.mxu0 0.0
      %149 = vmatprep.mubr.f32.mxu0 0.0
      %150 = vmatmul.mubr.f32.gmra.mrb[0].mxu0 %v83
      %v151 = vpop.f32.mrb[0].mxu0
      %v152 = vadd.f32 0.0, %v151
      %v153 = vpop.f32.mrb[0].mxu0
      %v154 = vadd.f32 0.0, %v153
      %155 = vdwg.mxu0
      %156 = vmatprep.subr.mxu0 %v69
      %157 = vmatpush1.msra.mxu0 %v68
      %158 = vmatprep.subr.mxu0 %v73
      %159 = vmatpush1.msra.mxu0 %v72
      %160 = vmatprep.subr.mxu0 %v77
      %161 = vmatpush1.msra.mxu0 %v76
      %162 = vmatprep.subr.mxu0 %v81
      %163 = vmatpush1.msra.mxu0 %v80
      %164 = vmatprep.subr.mxu0 0.0
      %165 = vmatpush1.msra.mxu0 0.0
      %166 = vmatprep.subr.mxu0 0.0
      %167 = vmatpush1.msra.mxu0 0.0
      %168 = vmatprep.subr.mxu0 0.0
      %169 = vmatpush1.msra.mxu0 0.0
      %170 = vmatprep.subr.mxu0 0.0
      %171 = vmatpush1.msra.mxu0 0.0
      %172 = vmatprep.subr.mxu0 0.0
      %173 = vmatpush1.msra.mxu0 0.0
      %174 = vmatprep.subr.mxu0 0.0
      %175 = vmatpush1.msra.mxu0 0.0
      %176 = vmatprep.subr.mxu0 0.0
      %177 = vmatpush1.msra.mxu0 0.0
      %178 = vmatprep.subr.mxu0 0.0
      %179 = vmatpush1.msra.mxu0 0.0
      %180 = vmatprep.subr.mxu0 0.0
      %181 = vmatpush1.msra.mxu0 0.0
      %182 = vmatprep.subr.mxu0 0.0
      %183 = vmatpush1.msra.mxu0 0.0
      %184 = vmatprep.subr.mxu0 0.0
      %185 = vmatpush1.msra.mxu0 0.0
      %186 = vmatprep.subr.mxu0 0.0
      %187 = vmatpush1.msra.mxu0 0.0
      %188 = vmatprep.subr.mxu0 0.0
      %189 = vmatpush1.msra.mxu0 0.0
      %190 = vmatprep.subr.mxu0 0.0
      %191 = vmatpush1.msra.mxu0 0.0
      %192 = vmatprep.subr.mxu0 0.0
      %193 = vmatpush1.msra.mxu0 0.0
      %194 = vmatprep.subr.mxu0 0.0
      %195 = vmatpush1.msra.mxu0 0.0
      %196 = vmatprep.subr.mxu0 0.0
      %197 = vmatpush1.msra.mxu0 0.0
      %198 = vmatprep.subr.mxu0 0.0
      %199 = vmatpush1.msra.mxu0 0.0
      %200 = vmatprep.subr.mxu0 0.0
      %201 = vmatpush1.msra.mxu0 0.0
      %202 = vmatprep.subr.mxu0 0.0
      %203 = vmatpush1.msra.mxu0 0.0
      %204 = vmatprep.subr.mxu0 0.0
      %205 = vmatpush1.msra.mxu0 0.0
      %206 = vmatprep.subr.mxu0 0.0
      %207 = vmatpush1.msra.mxu0 0.0
      %208 = vmatprep.subr.mxu0 0.0
      %209 = vmatpush1.msra.mxu0 0.0
      %210 = vmatprep.subr.mxu0 0.0
      %211 = vmatpush1.msra.mxu0 0.0
      %212 = vmatprep.subr.mxu0 0.0
      %213 = vmatpush1.msra.mxu0 0.0
      %214 = vmatprep.subr.mxu0 0.0
      %215 = vmatpush1.msra.mxu0 0.0
      %216 = vmatprep.subr.mxu0 0.0
      %217 = vmatpush1.msra.mxu0 0.0
      %218 = vmatprep.subr.mxu0 0.0
      %219 = vmatpush1.msra.mxu0 0.0
      %220 = vmatprep.mubr.f32.mxu0 0.0
      %221 = vmatmul.mubr.f32.gmra.mrb[0].mxu0 %v83
      %v222 = vpop.f32.mrb[0].mxu0
      %v223 = vadd.f32 0.0, %v222
      %v224 = vpop.f32.mrb[0].mxu0
      %v225 = vadd.f32 0.0, %v224
      %226 = vdwg.mxu0
      %v227 = vmul.f32 %v152, %v152
      %vm228 = vcmask 1041408
      %v229 = vsel %vm228, %v227, 0.0
      %230 = vadd.xlane.f32.xlu0 %v229
      %v231 = vpop.xlane.xlu0 %230
      %v232 = vrsqrt.pop %v231
      %v233 = vmul.f32 %v231, %v232
      %vm234 = vcmp.eq.f32.partialorder %v231, inf
      %v235 = vsel %vm234, %v231, %v233
      %vm236 = vcmp.eq.f32.partialorder %v231, 0.0
      %v237 = vand.u32 %v231, 2147483648
      %v238 = vsel %vm236, %v237, %v235
      %v239 = vmax.f32 %v238, 1e-05
      %v240 = vrcp.pop %v239
      %s241 = sld [smem:[#allocation3]]
      %v242 = vmul.f32 %v152, %v240
      %v243 = vstv %s241
      %v244 = vmul.f32 %v243, %v242
      %v245 = vadd.f32 %v244, 0.0
      %v246 = vmul.f32 %v154, %v154
      %v247 = vsel %vm228, %v246, 0.0
      %248 = vadd.xlane.f32.xlu0 %v247
      %v249 = vpop.xlane.xlu0 %248
      %v250 = vrsqrt.pop %v249
      %v251 = vmul.f32 %v249, %v250
      %vm252 = vcmp.eq.f32.partialorder %v249, inf
      %v253 = vsel %vm252, %v249, %v251
      %vm254 = vcmp.eq.f32.partialorder %v249, 0.0
      %v255 = vand.u32 %v249, 2147483648
      %v256 = vsel %vm254, %v255, %v253
      %v257 = vmax.f32 %v256, 1e-05
      %v258 = vrcp.pop %v257
      %s259 = sld [smem:[#allocation3 + $0x1]]
      %v260 = vmul.f32 %v154, %v258
      %v261 = vstv %s259
      %v262 = vmul.f32 %v261, %v260
      %v263 = vadd.f32 %v245, %v262
      %v264 = vmul.f32 %v223, %v223
      %v265 = vsel %vm228, %v264, 0.0
      %266 = vadd.xlane.f32.xlu0 %v265
      %v267 = vpop.xlane.xlu0 %266
      %v268 = vrsqrt.pop %v267
      %v269 = vmul.f32 %v267, %v268
      %vm270 = vcmp.eq.f32.partialorder %v267, inf
      %v271 = vsel %vm270, %v267, %v269
      %vm272 = vcmp.eq.f32.partialorder %v267, 0.0
      %v273 = vand.u32 %v267, 2147483648
      %v274 = vsel %vm272, %v273, %v271
      %v275 = vmax.f32 %v274, 1e-05
      %v276 = vrcp.pop %v275
      %s277 = sld [smem:[#allocation3 + $0x2]]
      %v278 = vmul.f32 %v223, %v276
      %v279 = vstv %s277
      %v280 = vmul.f32 %v279, %v278
      %v281 = vadd.f32 %v263, %v280
      %v282 = vmul.f32 %v225, %v225
      %v283 = vsel %vm228, %v282, 0.0
      %284 = vadd.xlane.f32.xlu0 %v283
      %v285 = vpop.xlane.xlu0 %284
      %v286 = vrsqrt.pop %v285
      %v287 = vmul.f32 %v285, %v286
      %vm288 = vcmp.eq.f32.partialorder %v285, inf
      %v289 = vsel %vm288, %v285, %v287
      %vm290 = vcmp.eq.f32.partialorder %v285, 0.0
      %v291 = vand.u32 %v285, 2147483648
      %v292 = vsel %vm290, %v291, %v289
      %v293 = vmax.f32 %v292, 1e-05
      %v294 = vrcp.pop %v293
      %s295 = sld [smem:[#allocation3 + $0x3]]
      %v296 = vmul.f32 %v225, %v294
      %v297 = vstv %s295
      %v298 = vmul.f32 %v297, %v296
      %v299 = vadd.f32 %v281, %v298
      %v300 = vtanh.pop %v299
      %301 = vst [vmem:[#allocation6] sm:$0x3] %v300
    $region25: #{_forward_impl.1} parent=1 // pred_fallthru
      _
    // Predicated region
    $region26: #{_forward_impl.1} parent=1 // pred_check
      _
    $region27: #{_forward_impl.1} parent=1 // pred_check_branch
      %303 = sbr.rel (0) target = $region29
    $region28: #{_forward_impl.1} parent=1 // pred_region
      %s305 = ssub.s32 32, 32
      %306 = vsyncadd [#allocation4], %s305
      %s308 = sshll.u32 [#allocation6], 4
      %s309 = int_to_ptr.vmem [resolvable:$true] %s308
      %311 = dma.vmem_to_hbm [thread:$0]  %s309, 32, %s3, [#allocation4]
    $region29: #{_forward_impl.1} parent=1 // pred_fallthru
      _
    // Predicated region
    $region30: #{_forward_impl.1} parent=1 // pred_check
      _
    $region31: #{_forward_impl.1} parent=1 // pred_check_branch
      %313 = sbr.rel (0) target = $region33
    $region32: #{_forward_impl.1} parent=1 // pred_region
      %314 = dma.done [#allocation4], 32
    $region33: #{_forward_impl.1} parent=1 // pred_fallthru
      _
    %315 = vsyncpa [#allocation4], 1
    %316 = vsyncpa [#allocation5], 1

</llo_original>
